<compile_context>
chip_gen: v7x
topology: tpu7x:2x2x1
jax: 0.10.0
libtpu: 0.0.40
codegen_flags: <defaults>
</compile_context>

<pallas_src>
import jax
import jax.numpy as jnp
from jax.experimental import pallas as pl
from jax.experimental.pallas import tpu as pltpu

_LANE = 128
_MAX_TILE_ROWS_F32 = 2048   # bf16/int8 get proportionally more rows


def _make_outconv_kernel(c_in, c_out):
    def kernel(w_ref, b_ref, x_ref, o_ref):
        # w_ref: SMEM (c_out*c_in,) f32    b_ref: SMEM (c_out,) f32
        # x_ref: VMEM (tile_n, c_in, tile_r, 128)
        # o_ref: VMEM (tile_n, c_out, tile_r, 128)
        x = x_ref[...].astype(jnp.float32)
        # Hoisted: each input plane is loaded/cast exactly once, not per c_out.
        planes = [x[:, c] for c in range(c_in)]      # each (tile_n, tile_r, 128)
        outs = []
        for o in range(c_out):
            acc = planes[0] * w_ref[o * c_in + 0]
            for c in range(1, c_in):
                acc = acc + planes[c] * w_ref[o * c_in + c]
            z = acc + b_ref[o]
            # sigmoid(z) == 0.5 * tanh(0.5 * z) + 0.5  (exact; tanh -> EUP)
            outs.append((0.5 * jnp.tanh(0.5 * z) + 0.5).astype(o_ref.dtype))
        o_ref[...] = jnp.stack(outs, axis=1)
    return kernel


def _choose_tiles(N, rows, c_in, c_out, itemsize):
    """Pick (tile_n, tile_r, vmem_limit_bytes)."""
    # Sub-32-bit dtypes pack along sublanes: tile_r must be a multiple of the
    # packing factor (8 for f32, 16 for bf16, 32 for int8/fp8) unless it is
    # the full dimension.
    row_mult = max(8, 32 // max(itemsize, 1))

    # Chip-aware VMEM budget for the double-buffered I/O window.
    # v7x: 64 MiB per TensorCore -> ~20 MiB budget; v5e/v6e: 128 MiB -> 24 MiB.
    try:
        vmem_phys = int(getattr(pltpu.get_tpu_info(), "vmem_capacity_bytes",
                                64 * 1024 * 1024))
    except Exception:
        vmem_phys = 64 * 1024 * 1024        # conservative (v7x-safe) fallback
    if vmem_phys <= 64 * 1024 * 1024:
        budget = 20 * 1024 * 1024
    else:
        budget = 24 * 1024 * 1024

    # Double-buffered bytes per (row of 128 lanes) per batch element.
    bytes_per_row = (c_in + c_out) * _LANE * itemsize * 2
    max_rows = _MAX_TILE_ROWS_F32 * max(1, 4 // max(itemsize, 1))

    if rows <= row_mult:
        tile_r = rows                        # full dim -> (8,128) rule satisfied
    else:
        t = min(rows, max_rows, max(row_mult, budget // bytes_per_row))
        tile_r = max(row_mult, (t // row_mult) * row_mult)

    # Batch block: pack several images per step when the feature map is small.
    per_n_bytes = max(1, tile_r * bytes_per_row)
    tile_n = int(max(1, min(N, budget // per_n_bytes)))

    # Guarantee >= 2 grid steps when possible so both v7x TensorCores work
    # (costs only ~0.35us extra on single-core v5e/v6e).
    def _steps(tn, tr):
        return (-(-N // tn)) * (-(-rows // tr))

    if _steps(tile_n, tile_r) < 2:
        if N >= 2:
            tile_n = (N + 1) // 2
        elif rows > row_mult:
            half = -(-rows // 2)
            tile_r = max(row_mult, (-(-half // row_mult)) * row_mult)

    inflight = tile_n * tile_r * bytes_per_row          # double-buffered I/O
    vmem_limit = int(min(max(vmem_phys - 8 * 1024 * 1024, 16 * 1024 * 1024),
                         max(32 * 1024 * 1024, 2 * inflight)))
    return tile_n, tile_r, vmem_limit


def outconv_forward(x_nchw, weight, bias):
    """x_nchw: (N, C_in, H, W); weight: (C_out, C_in, 1, 1); bias: (C_out,)."""
    N, C_in, H, W = x_nchw.shape
    C_out = weight.shape[0]
    HW = H * W

    # Metadata-only reshape NCHW -> (N, C_in, HW).
    x_flat = x_nchw.reshape(N, C_in, HW)
    pad = (-HW) % _LANE
    if pad:
        # TODO(synk): fold this pad (and the matching slice below) into a
        # masked ragged last block instead of a separate XLA pad/slice pass;
        # it costs an extra HBM round trip when H*W % 128 != 0.  No-op for
        # the usual power-of-two UNet spatial sizes.
        x_flat = jnp.pad(x_flat, ((0, 0), (0, 0), (0, pad)))
    HW_p = HW + pad
    rows = HW_p // _LANE
    x4 = x_flat.reshape(N, C_in, rows, _LANE)

    tile_n, tile_r, vmem_limit = _choose_tiles(N, rows, C_in, C_out,
                                               x4.dtype.itemsize)
    grid = (pl.cdiv(N, tile_n), pl.cdiv(rows, tile_r))

    # 1x1 conv weights / bias as flat f32 scalars (land in SMEM via prefetch).
    w_flat = weight.reshape(C_out, C_in).astype(jnp.float32).reshape(-1)
    b_flat = bias.astype(jnp.float32).reshape(-1)

    out4 = pl.pallas_call(
        _make_outconv_kernel(C_in, C_out),
        out_shape=jax.ShapeDtypeStruct((N, C_out, rows, _LANE), x_nchw.dtype),
        grid_spec=pltpu.PrefetchScalarGridSpec(
            num_scalar_prefetch=2,
            grid=grid,
            in_specs=[
                pl.BlockSpec((tile_n, C_in, tile_r, _LANE),
                             lambda n, s, w, b: (n, 0, s, 0)),
            ],
            out_specs=pl.BlockSpec((tile_n, C_out, tile_r, _LANE),
                                   lambda n, s, w, b: (n, 0, s, 0)),
        ),
        compiler_params=pltpu.CompilerParams(
            dimension_semantics=("parallel", "parallel"),
            vmem_limit_bytes=vmem_limit),
    )(w_flat, b_flat, x4)

    # Metadata-only reshapes back to NCHW (slice only if we padded).
    out = out4.reshape(N, C_out, HW_p)
    if pad:
        out = out[:, :, :HW]
    return out.reshape(N, C_out, H, W)


# Note: an MXU variant is intentionally NOT provided.  With C_in=4 / C_out=3
# the contraction uses ~3% of an MXU tile and the op is HBM-bound on every
# generation, so the VPU path is the right choice until C_in grows toward 128.


def _reference(x, weight, bias):
    C_out, C_in = weight.shape[:2]
    return jax.nn.sigmoid(
        jnp.einsum("nchw,oc->nohw", x, weight.reshape(C_out, C_in))
        + bias[None, :, None, None])


if __name__ == "__main__":
    key = jax.random.PRNGKey(0)
    k_x, k_w, k_b, k_x2 = jax.random.split(key, 4)

    N, C_in, H, W = 2, 4, 16, 16
    C_out = 3

    x = jax.random.normal(k_x, (N, C_in, H, W), dtype=jnp.float32)

    # Deterministic Conv2d-style init (uniform in +/- 1/sqrt(fan_in)).
    fan_in = C_in * 1 * 1
    bound = 1.0 / (fan_in ** 0.5)
    weight = jax.random.uniform(k_w, (C_out, C_in, 1, 1), jnp.float32,
                                minval=-bound, maxval=bound)
    bias = jax.random.uniform(k_b, (C_out,), jnp.float32,
                              minval=-bound, maxval=bound)

    fwd = jax.jit(outconv_forward)

    out = fwd(x, weight, bias)
    jax.block_until_ready(out)
    ref = _reference(x, weight, bias)
    assert out.shape == (N, C_out, H, W)
    assert jnp.allclose(out, ref, atol=1e-5, rtol=1e-5)

    # Ragged spatial size (H*W not a multiple of 128) exercises the pad path.
    x2 = jax.random.normal(k_x2, (1, C_in, 9, 14), dtype=jnp.float32)
    out2 = fwd(x2, weight, bias)
    jax.block_until_ready(out2)
    ref2 = _reference(x2, weight, bias)
    assert out2.shape == (1, C_out, 9, 14)
    assert jnp.allclose(out2, ref2, atol=1e-5, rtol=1e-5)

    print("KERNEL_OK")
</pallas_src>

<mosaic_0001>
module attributes {stable_mosaic.version = 11 : i64} {
  func.func @kernel(%arg0: i32, %arg1: i32, %arg2: memref<12xf32, #tpu.memory_space<smem>>, %arg3: memref<3xf32, #tpu.memory_space<smem>>, %arg4: memref<1x4x2x128xf32, #tpu.memory_space<vmem>>, %arg5: memref<1x3x2x128xf32, #tpu.memory_space<vmem>>) attributes {dimension_semantics = [#tpu.dimension_semantics<parallel>, #tpu.dimension_semantics<parallel>], iteration_bounds = array<i64: 2, 1>, scalar_prefetch = 2 : i64, scratch_operands = 0 : i64, tpu.core_type = #tpu.core_type<tc>, window_params = [{transform_indices = @transform_0, window_bounds = array<i64: 1, 4, 2, 128>}, {transform_indices = @transform_1, window_bounds = array<i64: 1, 3, 2, 128>}]} {
    %c0 = arith.constant 0 : index
    %c0_0 = arith.constant 0 : index
    %c0_1 = arith.constant 0 : index
    %c0_2 = arith.constant 0 : index
    %0 = vector.load %arg4[%c0, %c0_0, %c0_1, %c0_2] : memref<1x4x2x128xf32, #tpu.memory_space<vmem>>, vector<1x4x2x128xf32>
    %1 = vector.extract_strided_slice %0 {offsets = [0, 0, 0, 0], sizes = [1, 1, 2, 128], strides = [1, 1, 1, 1]} : vector<1x4x2x128xf32> to vector<1x1x2x128xf32>
    %2 = vector.shape_cast %1 : vector<1x1x2x128xf32> to vector<1x2x128xf32>
    %3 = vector.extract_strided_slice %0 {offsets = [0, 1, 0, 0], sizes = [1, 1, 2, 128], strides = [1, 1, 1, 1]} : vector<1x4x2x128xf32> to vector<1x1x2x128xf32>
    %4 = vector.shape_cast %3 : vector<1x1x2x128xf32> to vector<1x2x128xf32>
    %5 = vector.extract_strided_slice %0 {offsets = [0, 2, 0, 0], sizes = [1, 1, 2, 128], strides = [1, 1, 1, 1]} : vector<1x4x2x128xf32> to vector<1x1x2x128xf32>
    %6 = vector.shape_cast %5 : vector<1x1x2x128xf32> to vector<1x2x128xf32>
    %7 = vector.extract_strided_slice %0 {offsets = [0, 3, 0, 0], sizes = [1, 1, 2, 128], strides = [1, 1, 1, 1]} : vector<1x4x2x128xf32> to vector<1x1x2x128xf32>
    %8 = vector.shape_cast %7 : vector<1x1x2x128xf32> to vector<1x2x128xf32>
    %c0_3 = arith.constant 0 : index
    %9 = memref.load %arg2[%c0_3] : memref<12xf32, #tpu.memory_space<smem>>
    %10 = vector.broadcast %9 : f32 to vector<1x2x128xf32>
    %11 = arith.mulf %2, %10 : vector<1x2x128xf32>
    %c1 = arith.constant 1 : index
    %12 = memref.load %arg2[%c1] : memref<12xf32, #tpu.memory_space<smem>>
    %13 = vector.broadcast %12 : f32 to vector<1x2x128xf32>
    %14 = arith.mulf %4, %13 : vector<1x2x128xf32>
    %15 = arith.addf %11, %14 : vector<1x2x128xf32>
    %c2 = arith.constant 2 : index
    %16 = memref.load %arg2[%c2] : memref<12xf32, #tpu.memory_space<smem>>
    %17 = vector.broadcast %16 : f32 to vector<1x2x128xf32>
    %18 = arith.mulf %6, %17 : vector<1x2x128xf32>
    %19 = arith.addf %15, %18 : vector<1x2x128xf32>
    %c3 = arith.constant 3 : index
    %20 = memref.load %arg2[%c3] : memref<12xf32, #tpu.memory_space<smem>>
    %21 = vector.broadcast %20 : f32 to vector<1x2x128xf32>
    %22 = arith.mulf %8, %21 : vector<1x2x128xf32>
    %23 = arith.addf %19, %22 : vector<1x2x128xf32>
    %c0_4 = arith.constant 0 : index
    %24 = memref.load %arg3[%c0_4] : memref<3xf32, #tpu.memory_space<smem>>
    %25 = vector.broadcast %24 : f32 to vector<1x2x128xf32>
    %26 = arith.addf %23, %25 : vector<1x2x128xf32>
    %cst = arith.constant 5.000000e-01 : f32
    %27 = vector.broadcast %cst : f32 to vector<1x2x128xf32>
    %28 = arith.mulf %27, %26 : vector<1x2x128xf32>
    %29 = math.tanh %28 : vector<1x2x128xf32>
    %cst_5 = arith.constant 5.000000e-01 : f32
    %30 = vector.broadcast %cst_5 : f32 to vector<1x2x128xf32>
    %31 = arith.mulf %30, %29 : vector<1x2x128xf32>
    %cst_6 = arith.constant 5.000000e-01 : f32
    %32 = vector.broadcast %cst_6 : f32 to vector<1x2x128xf32>
    %33 = arith.addf %31, %32 : vector<1x2x128xf32>
    %c4 = arith.constant 4 : index
    %34 = memref.load %arg2[%c4] : memref<12xf32, #tpu.memory_space<smem>>
    %35 = vector.broadcast %34 : f32 to vector<1x2x128xf32>
    %36 = arith.mulf %2, %35 : vector<1x2x128xf32>
    %c5 = arith.constant 5 : index
    %37 = memref.load %arg2[%c5] : memref<12xf32, #tpu.memory_space<smem>>
    %38 = vector.broadcast %37 : f32 to vector<1x2x128xf32>
    %39 = arith.mulf %4, %38 : vector<1x2x128xf32>
    %40 = arith.addf %36, %39 : vector<1x2x128xf32>
    %c6 = arith.constant 6 : index
    %41 = memref.load %arg2[%c6] : memref<12xf32, #tpu.memory_space<smem>>
    %42 = vector.broadcast %41 : f32 to vector<1x2x128xf32>
    %43 = arith.mulf %6, %42 : vector<1x2x128xf32>
    %44 = arith.addf %40, %43 : vector<1x2x128xf32>
    %c7 = arith.constant 7 : index
    %45 = memref.load %arg2[%c7] : memref<12xf32, #tpu.memory_space<smem>>
    %46 = vector.broadcast %45 : f32 to vector<1x2x128xf32>
    %47 = arith.mulf %8, %46 : vector<1x2x128xf32>
    %48 = arith.addf %44, %47 : vector<1x2x128xf32>
    %c1_7 = arith.constant 1 : index
    %49 = memref.load %arg3[%c1_7] : memref<3xf32, #tpu.memory_space<smem>>
    %50 = vector.broadcast %49 : f32 to vector<1x2x128xf32>
    %51 = arith.addf %48, %50 : vector<1x2x128xf32>
    %cst_8 = arith.constant 5.000000e-01 : f32
    %52 = vector.broadcast %cst_8 : f32 to vector<1x2x128xf32>
    %53 = arith.mulf %52, %51 : vector<1x2x128xf32>
    %54 = math.tanh %53 : vector<1x2x128xf32>
    %cst_9 = arith.constant 5.000000e-01 : f32
    %55 = vector.broadcast %cst_9 : f32 to vector<1x2x128xf32>
    %56 = arith.mulf %55, %54 : vector<1x2x128xf32>
    %cst_10 = arith.constant 5.000000e-01 : f32
    %57 = vector.broadcast %cst_10 : f32 to vector<1x2x128xf32>
    %58 = arith.addf %56, %57 : vector<1x2x128xf32>
    %c8 = arith.constant 8 : index
    %59 = memref.load %arg2[%c8] : memref<12xf32, #tpu.memory_space<smem>>
    %60 = vector.broadcast %59 : f32 to vector<1x2x128xf32>
    %61 = arith.mulf %2, %60 : vector<1x2x128xf32>
    %c9 = arith.constant 9 : index
    %62 = memref.load %arg2[%c9] : memref<12xf32, #tpu.memory_space<smem>>
    %63 = vector.broadcast %62 : f32 to vector<1x2x128xf32>
    %64 = arith.mulf %4, %63 : vector<1x2x128xf32>
    %65 = arith.addf %61, %64 : vector<1x2x128xf32>
    %c10 = arith.constant 10 : index
    %66 = memref.load %arg2[%c10] : memref<12xf32, #tpu.memory_space<smem>>
    %67 = vector.broadcast %66 : f32 to vector<1x2x128xf32>
    %68 = arith.mulf %6, %67 : vector<1x2x128xf32>
    %69 = arith.addf %65, %68 : vector<1x2x128xf32>
    %c11 = arith.constant 11 : index
    %70 = memref.load %arg2[%c11] : memref<12xf32, #tpu.memory_space<smem>>
    %71 = vector.broadcast %70 : f32 to vector<1x2x128xf32>
    %72 = arith.mulf %8, %71 : vector<1x2x128xf32>
    %73 = arith.addf %69, %72 : vector<1x2x128xf32>
    %c2_11 = arith.constant 2 : index
    %74 = memref.load %arg3[%c2_11] : memref<3xf32, #tpu.memory_space<smem>>
    %75 = vector.broadcast %74 : f32 to vector<1x2x128xf32>
    %76 = arith.addf %73, %75 : vector<1x2x128xf32>
    %cst_12 = arith.constant 5.000000e-01 : f32
    %77 = vector.broadcast %cst_12 : f32 to vector<1x2x128xf32>
    %78 = arith.mulf %77, %76 : vector<1x2x128xf32>
    %79 = math.tanh %78 : vector<1x2x128xf32>
    %cst_13 = arith.constant 5.000000e-01 : f32
    %80 = vector.broadcast %cst_13 : f32 to vector<1x2x128xf32>
    %81 = arith.mulf %80, %79 : vector<1x2x128xf32>
    %cst_14 = arith.constant 5.000000e-01 : f32
    %82 = vector.broadcast %cst_14 : f32 to vector<1x2x128xf32>
    %83 = arith.addf %81, %82 : vector<1x2x128xf32>
    %84 = vector.shape_cast %33 : vector<1x2x128xf32> to vector<1x1x2x128xf32>
    %85 = vector.shape_cast %58 : vector<1x2x128xf32> to vector<1x1x2x128xf32>
    %86 = vector.shape_cast %83 : vector<1x2x128xf32> to vector<1x1x2x128xf32>
    %87 = tpu.concatenate %84, %85, %86 in 1 : vector<1x1x2x128xf32>, vector<1x1x2x128xf32>, vector<1x1x2x128xf32> -> vector<1x3x2x128xf32>
    %c0_15 = arith.constant 0 : index
    %c0_16 = arith.constant 0 : index
    %c0_17 = arith.constant 0 : index
    %c0_18 = arith.constant 0 : index
    %88 = vector.load %arg5[%c0_15, %c0_16, %c0_17, %c0_18] : memref<1x3x2x128xf32, #tpu.memory_space<vmem>>, vector<1x3x2x128xf32>
    tpu.vector_store %arg5[%c0_15, %c0_16, %c0_17, %c0_18], %87 {strides = array<i32>} : memref<1x3x2x128xf32, #tpu.memory_space<vmem>>, vector<1x3x2x128xf32>,
    return
  }
  func.func @transform_0(%arg0: i32, %arg1: i32, %arg2: memref<12xf32, #tpu.memory_space<smem>>, %arg3: memref<3xf32, #tpu.memory_space<smem>>) -> (i32, i32, i32, i32) {
    %c0_i32 = arith.constant 0 : i32
    %c0_i32_0 = arith.constant 0 : i32
    %c0_i32_1 = arith.constant 0 : i32
    return %arg0, %c0_i32, %arg1, %c0_i32_0 : i32, i32, i32, i32
  }
  func.func @transform_1(%arg0: i32, %arg1: i32, %arg2: memref<12xf32, #tpu.memory_space<smem>>, %arg3: memref<3xf32, #tpu.memory_space<smem>>) -> (i32, i32, i32, i32) {
    %c0_i32 = arith.constant 0 : i32
    %c0_i32_0 = arith.constant 0 : i32
    %c0_i32_1 = arith.constant 0 : i32
    return %arg0, %c0_i32, %arg1, %c0_i32_0 : i32, i32, i32, i32
  }
}

</mosaic_0001>

<llo_original>
// kernel: outconv_forward.1
$region0: #{outconv_forward.1}
  #allocation0 [shape = 'u32[]', space=smem, size = 0x4, offset = 0x4, fixed_abs, tag = 'smem constant byte address 0x4 - core index']
  #allocation1 [shape = 'u32[144,128]{1,0:T(1,128)}', space=vmem, size = 0x12000, scoped, tag = 'internal scratch']
  #allocation2 [shape = 's32[1]{0}', space=sflag, size = 0x4, scoped, tag = 'scoped memory for outconv_forward.1']
  #allocation3 [shape = 'u8[512]{0}', space=smem, size = 0x200, scoped, tag = 'prefetched SMEM operand 0']
  #allocation4 [shape = 'u8[512]{0}', space=smem, size = 0x200, scoped, tag = 'prefetched SMEM operand 1']
  %s0 = inlined_call_operand.vmem [shape: f32[12], index: 0, kind: input, shape index: {}]
  %s1 = inlined_call_operand.vmem [shape: f32[3], index: 1, kind: input, shape index: {}]
  %s2 = inlined_call_operand.vmem [shape: f32[2,4,2,128], index: 2, kind: input, shape index: {}]
  %s3 = inlined_call_operand.vmem [shape: f32[2,3,2,128], index: 3, kind: output, shape index: {}]
  %s4 = sld [smem:[#allocation0]]
  $region37: #{outconv_forward.1} parent=0
    _
  %s6 = ssub.s32 1, %s4
  %s7 = scalar_select 0, %s6, %s4
  %s8 = sshll.u32 %s0, 4
  %s9 = int_to_ptr.vmem [resolvable:$true] %s8
  %11 = dma.vmem_to_smem %s9, 16, [#allocation3], [#allocation2]
  %s12 = sshll.u32 %s1, 4
  %s13 = int_to_ptr.vmem [resolvable:$true] %s12
  %15 = dma.vmem_to_smem %s13, 16, [#allocation4], [#allocation2]
  %16 = dma.done [#allocation2], 32
  %17 = sfence
  loop: start=0, step=1, limit=4
  $region2: #{outconv_forward.1} parent=0 // loop_pre_header
    _
  $region3: #{outconv_forward.1} parent=0 // loop_header
    %s19 = sphi 0, %s23
    %p20 = scmp.ge.s32.totalorder %s19, 4
    %s26 = sphi 0, %s38
    %s27 = sphi 0, %s34
    %s28 = sphi 0, %s26
    %s29 = sphi 0, %s27
    %s30 = sphi 0, %s28
    %s31 = sphi 0, %s29
    %s43 = sphi 0, %s45
    %s46 = sphi 0, %s43
    %s47 = sphi 0, %s46
    %s63 = sphi 0, %s47
    %s71 = sphi 0, %s73
    %s74 = sphi 0, %s71
    %s75 = sphi 0, %s74
    %s91 = sphi 0, %s75
  $region4: #{outconv_forward.1} parent=0 // loop_header_branch
    %22 = sbr.rel (%p20) target = $region8
  $region5: #{outconv_forward.1} parent=0 // loop_body
    %s24 = ssub.s32 %s19, 1
    %s25 = ssub.s32 %s19, 2
    %s32 = sadd.s32 1, %s27
    %p33 = scmp.ge.s32.totalorder %s32, 1
    %s34 = scalar_select %p33, 0, %s32
    %s35 = sadd.s32 1, %s26
    %s36 = scalar_select %p33, %s35, %s26
    %p37 = scmp.ge.s32.totalorder %s36, 2
    %s38 = scalar_select %p37, 0, %s36
    %s39 = ssub.s32 %s26, %s38
    %s40 = ssub.s32 %s27, %s34
    %s41 = sor.u32 %s39, %s40
    %p42 = scmp.eq.s32.totalorder %s41, 0
    %s44 = sadd.s32 %s43, 1
    %s45 = scalar_select %p42, %s43, %s44
    %p48 = pneg %p42
    %p49 = scmp.eq.s32.totalorder %s19, 1
    %p50 = por %p48, %p49
    %p51 = scmp.ne.s32.totalorder %s43, %s46
    %p52 = scmp.eq.s32.totalorder %s19, 0
    %p53 = por %p51, %p52
    %p54 = scmp.ne.s32.totalorder %s43, %s46
    %p55 = scmp.eq.s32.totalorder %s24, 1
    %p56 = por %p54, %p55
    %p57 = scmp.ne.s32.totalorder %s46, %s47
    %p58 = scmp.eq.s32.totalorder %s24, 0
    %p59 = por %p57, %p58
    %p60 = scmp.ne.s32.totalorder %s46, %s47
    %p61 = scmp.eq.s32.totalorder %s25, 1
    %p62 = por %p60, %p61
    %p64 = scmp.ne.s32.totalorder %s47, %s63
    %p65 = scmp.eq.s32.totalorder %s25, 0
    %p66 = por %p64, %p65
    %s67 = ssub.s32 %s26, %s38
    %s68 = ssub.s32 %s27, %s34
    %s69 = sor.u32 %s67, %s68
    %p70 = scmp.eq.s32.totalorder %s69, 0
    %s72 = sadd.s32 %s71, 1
    %s73 = scalar_select %p70, %s71, %s72
    %p76 = pneg %p70
    %p77 = scmp.eq.s32.totalorder %s19, 1
    %p78 = por %p76, %p77
    %p79 = scmp.ne.s32.totalorder %s71, %s74
    %p80 = scmp.eq.s32.totalorder %s19, 0
    %p81 = por %p79, %p80
    %p82 = scmp.ne.s32.totalorder %s71, %s74
    %p83 = scmp.eq.s32.totalorder %s24, 1
    %p84 = por %p82, %p83
    %p85 = scmp.ne.s32.totalorder %s74, %s75
    %p86 = scmp.eq.s32.totalorder %s24, 0
    %p87 = por %p85, %p86
    %p88 = scmp.ne.s32.totalorder %s74, %s75
    %p89 = scmp.eq.s32.totalorder %s25, 1
    %p90 = por %p88, %p89
    %p92 = scmp.ne.s32.totalorder %s75, %s91
    %p93 = scmp.eq.s32.totalorder %s25, 0
    %p94 = por %p92, %p93
    %p95 = scmp.le.s32.totalorder 1, %s19
    %p96 = scmp.lt.s32.totalorder %s19, 3
    %p97 = pnand %p95, %p96
    %p98 = pneg %p97
    // Predicated region
    $region9: #{outconv_forward.1} parent=5 // pred_check
      _
    $region10: #{outconv_forward.1} parent=5 // pred_check_branch
      %100 = sbr.rel (%p97) target = $region12
    $region11: #{outconv_forward.1} parent=5 // pred_region
      %s101 = ssub.s32 %s19, 1
    $region12: #{outconv_forward.1} parent=5 // pred_fallthru
      _
    %p102 = scmp.lt.s32.totalorder %s19, 2
    // Predicated region
    $region13: #{outconv_forward.1} parent=5 // pred_check
      %p103 = pneg %p102
    $region14: #{outconv_forward.1} parent=5 // pred_check_branch
      %105 = sbr.rel (%p103) target = $region16
    $region15: #{outconv_forward.1} parent=5 // pred_region
      // Predicated region
      $region17: #{outconv_forward.1} parent=15 // pred_check
        %p106 = pneg %p53
      $region18: #{outconv_forward.1} parent=15 // pred_check_branch
        %108 = sbr.rel (%p106) target = $region20
      $region19: #{outconv_forward.1} parent=15 // pred_region
        %p109 = scmp.lt.s32.totalorder %s26, 1
        %s110 = scalar_select %p109, %s26, 1
        %p111 = scmp.lt.s32.totalorder %s27, 0
        %s112 = scalar_select %p111, %s27, 0
        %s113 = smul.addr %s110, 4
        %s114 = sadd.s32 %s112, %s113
        %s115 = smul.addr %s114, 2
        %s116 = scalar_lea.vmem %s2, %s115
      $region20: #{outconv_forward.1} parent=15 // pred_fallthru
        _
    $region16: #{outconv_forward.1} parent=5 // pred_fallthru
      _
    %p117 = scmp.le.s32.totalorder 1, %s19
    %p118 = scmp.lt.s32.totalorder %s19, 3
    %p119 = pnand %p117, %p118
    %p120 = pneg %p119
    // Predicated region
    $region21: #{outconv_forward.1} parent=5 // pred_check
      _
    $region22: #{outconv_forward.1} parent=5 // pred_check_branch
      %122 = sbr.rel (%p119) target = $region24
    $region23: #{outconv_forward.1} parent=5 // pred_region
      %s123 = ssub.s32 %s19, 1
      %p124 = scmp.lt.s32.totalorder %s28, 1
      %s125 = scalar_select %p124, %s28, 1
      %p126 = scmp.lt.s32.totalorder %s29, 0
      %s127 = scalar_select %p126, %s29, 0
      %s128 = smul.addr %s125, 4
      %s129 = sadd.s32 %s127, %s128
      %s130 = smul.addr %s129, 2
      %s131 = scalar_lea.vmem %s2, %s130
      %p132 = pneg %p59
      %p133 = pneg %p56
      %p134 = pneg %p87
      %p135 = pneg %p84
      %p136 = scmp.lt.s32.totalorder %s28, 1
      %s137 = scalar_select %p136, %s28, 1
      %p138 = scmp.lt.s32.totalorder %s29, 0
      %s139 = scalar_select %p138, %s29, 0
      %s140 = smul.addr %s137, 3
      %s141 = sadd.s32 %s139, %s140
      %s142 = smul.addr %s141, 2
      %s143 = scalar_lea.vmem %s3, %s142
      %p144 = scmp.lt.s32.totalorder %s28, 1
      %s145 = scalar_select %p144, %s28, 1
      %p146 = scmp.lt.s32.totalorder %s29, 0
      %s147 = scalar_select %p146, %s29, 0
      %s148 = smul.addr %s145, 4
      %s149 = sadd.s32 %s147, %s148
      %s150 = smul.addr %s149, 2
      %s151 = scalar_lea.vmem %s2, %s150
      %p152 = scmp.lt.s32.totalorder %s28, 1
      %s153 = scalar_select %p152, %s28, 1
      %p154 = scmp.lt.s32.totalorder %s29, 0
      %s155 = scalar_select %p154, %s29, 0
      %s156 = smul.addr %s153, 3
      %s157 = sadd.s32 %s155, %s156
      %s158 = smul.addr %s157, 2
      %s159 = scalar_lea.vmem %s3, %s158
      %v160 = vld [vmem:[%s151] sm:$0x3]
      %v161 = vld [vmem:[%s151 + $0x2] sm:$0x3]
      %v162 = vld [vmem:[%s151 + $0x4] sm:$0x3]
      %v163 = vld [vmem:[%s151 + $0x6] sm:$0x3]
      %s164 = sld [smem:[#allocation3]]
      %v165 = vstv %s164
      %v166 = vmul.f32 %v160, %v165
      %s167 = sld [smem:[#allocation3 + $0x1]]
      %v168 = vstv %s167
      %v169 = vmul.f32 %v161, %v168
      %v170 = vadd.f32 %v166, %v169
      %s171 = sld [smem:[#allocation3 + $0x2]]
      %v172 = vstv %s171
      %v173 = vmul.f32 %v162, %v172
      %v174 = vadd.f32 %v170, %v173
      %s175 = sld [smem:[#allocation3 + $0x3]]
      %v176 = vstv %s175
      %v177 = vmul.f32 %v163, %v176
      %v178 = vadd.f32 %v174, %v177
      %s179 = sld [smem:[#allocation4]]
      %v180 = vstv %s179
      %v181 = vadd.f32 %v178, %v180
      %v182 = vmul.f32 %v181, 0.5
      %v183 = vtanh.pop %v182
      %v184 = vmul.f32 %v183, 0.5
      %v185 = vadd.f32 %v184, 0.5
      %s186 = sld [smem:[#allocation3 + $0x4]]
      %v187 = vstv %s186
      %v188 = vmul.f32 %v160, %v187
      %s189 = sld [smem:[#allocation3 + $0x5]]
      %v190 = vstv %s189
      %v191 = vmul.f32 %v161, %v190
      %v192 = vadd.f32 %v188, %v191
      %s193 = sld [smem:[#allocation3 + $0x6]]
      %v194 = vstv %s193
      %v195 = vmul.f32 %v162, %v194
      %v196 = vadd.f32 %v192, %v195
      %s197 = sld [smem:[#allocation3 + $0x7]]
      %v198 = vstv %s197
      %v199 = vmul.f32 %v163, %v198
      %v200 = vadd.f32 %v196, %v199
      %s201 = sld [smem:[#allocation4 + $0x1]]
      %v202 = vstv %s201
      %v203 = vadd.f32 %v200, %v202
      %v204 = vmul.f32 %v203, 0.5
      %v205 = vtanh.pop %v204
      %v206 = vmul.f32 %v205, 0.5
      %v207 = vadd.f32 %v206, 0.5
      %s208 = sld [smem:[#allocation3 + $0x8]]
      %v209 = vstv %s208
      %v210 = vmul.f32 %v160, %v209
      %s211 = sld [smem:[#allocation3 + $0x9]]
      %v212 = vstv %s211
      %v213 = vmul.f32 %v161, %v212
      %v214 = vadd.f32 %v210, %v213
      %s215 = sld [smem:[#allocation3 + $0xa]]
      %v216 = vstv %s215
      %v217 = vmul.f32 %v162, %v216
      %v218 = vadd.f32 %v214, %v217
      %s219 = sld [smem:[#allocation3 + $0xb]]
      %v220 = vstv %s219
      %v221 = vmul.f32 %v163, %v220
      %v222 = vadd.f32 %v218, %v221
      %s223 = sld [smem:[#allocation4 + $0x2]]
      %v224 = vstv %s223
      %v225 = vadd.f32 %v222, %v224
      %v226 = vmul.f32 %v225, 0.5
      %v227 = vtanh.pop %v226
      %v228 = vmul.f32 %v227, 0.5
      %v229 = vadd.f32 %v228, 0.5
      %230 = vst [vmem:[%s159] sm:$0x3] %v185
      %231 = vst [vmem:[%s159 + $0x2] sm:$0x3] %v207
      %232 = vst [vmem:[%s159 + $0x4] sm:$0x3] %v229
      %p233 = scmp.lt.s32.totalorder %s28, 1
      %s234 = scalar_select %p233, %s28, 1
      %p235 = scmp.lt.s32.totalorder %s29, 0
      %s236 = scalar_select %p235, %s29, 0
      %s237 = smul.addr %s234, 3
      %s238 = sadd.s32 %s236, %s237
      %s239 = smul.addr %s238, 2
      %s240 = scalar_lea.vmem %s3, %s239
      // Predicated region
      $region25: #{outconv_forward.1} parent=23 // pred_check
        %p241 = pneg %p84
      $region26: #{outconv_forward.1} parent=23 // pred_check_branch
        %243 = sbr.rel (%p241) target = $region28
      $region27: #{outconv_forward.1} parent=23 // pred_region
        _
      $region28: #{outconv_forward.1} parent=23 // pred_fallthru
        _
    $region24: #{outconv_forward.1} parent=5 // pred_fallthru
      _
    %p244 = scmp.le.s32.totalorder 2, %s19
    // Predicated region
    $region29: #{outconv_forward.1} parent=5 // pred_check
      %p245 = pneg %p244
    $region30: #{outconv_forward.1} parent=5 // pred_check_branch
      %247 = sbr.rel (%p245) target = $region32
    $region31: #{outconv_forward.1} parent=5 // pred_region
      %s248 = ssub.s32 %s19, 2
      // Predicated region
      $region33: #{outconv_forward.1} parent=31 // pred_check
        %p249 = pneg %p90
      $region34: #{outconv_forward.1} parent=31 // pred_check_branch
        %251 = sbr.rel (%p249) target = $region36
      $region35: #{outconv_forward.1} parent=31 // pred_region
        %p252 = scmp.lt.s32.totalorder %s30, 1
        %s253 = scalar_select %p252, %s30, 1
        %p254 = scmp.lt.s32.totalorder %s31, 0
        %s255 = scalar_select %p254, %s31, 0
        %s256 = smul.addr %s253, 3
        %s257 = sadd.s32 %s255, %s256
        %s258 = smul.addr %s257, 2
        %s259 = scalar_lea.vmem %s3, %s258
      $region36: #{outconv_forward.1} parent=31 // pred_fallthru
        _
    $region32: #{outconv_forward.1} parent=5 // pred_fallthru
      _
  $region6: #{outconv_forward.1} parent=0 // loop_footer
    %s23 = sadd.s32 1, %s19
  $region7: #{outconv_forward.1} parent=0 // loop_footer_branch
    %18 = sbr.rel target = $region3
  $region8: #{outconv_forward.1} parent=0 // loop_exit
    _

</llo_original>
